<compile_context>
chip_gen: v7x
topology: tpu7x:2x2x1
jax: 0.10.0
libtpu: 0.0.40
codegen_flags: <defaults>
</compile_context>

<pallas_src>
import functools

import jax
import jax.numpy as jnp
from jax.experimental import pallas as pl
from jax.experimental.pallas import tpu as pltpu

_HALF_LOG_2PI = 0.9189385332046727          # 0.5 * log(2*pi)
_DEFAULT_TILE_B = 2048                      # batch tile on the lane axis (multiple of 128)
_TILE_VMEM_BUDGET = 16 * 1024 * 1024        # double-buffered tile budget (v7x-safe)


def _round_up(x, m):
    return (x + m - 1) // m * m


# ---------------------------------------------------------------------------
# Fused in-kernel digamma / lgamma (elementwise VPU/EUP ops only).
# ---------------------------------------------------------------------------
def _psi_lgamma(x, need_lgamma):
    """Returns (digamma(x), lgamma(x) or None) for x > 0.

    Unconditional 4-step shift into the asymptotic regime (z = x + 4 >= 4):
      psi(x)    = psi(z)    - (1/x + 1/(x+1) + 1/(x+2) + 1/(x+3))
      lgamma(x) = lgamma(z) - log( x (x+1)(x+2)(x+3) )
    The four shift reciprocals AND the -1/(2z) Stirling term are combined
    into ONE exact divide; remaining series terms (<= 2e-2) use the EUP
    approx reciprocal.  Truncation error < 1e-6.  The folded divide uses
    q*z ~ x^5, overflow-safe in f32 for alpha < ~5e7 (plenty for Dirichlet
    evidence counts).
    """
    x1 = x + 1.0
    x2 = x + 2.0
    x3 = x + 3.0
    z = x + 4.0

    p01 = x * x1
    p23 = x2 * x3
    q = p01 * p23                                  # x(x+1)(x+2)(x+3)
    n = (x + x1) * p23 + (x2 + x3) * p01           # q * (1/x + 1/(x+1) + 1/(x+2) + 1/(x+3))
    shift = (n * z + 0.5 * q) / (q * z)            # shift sum + 1/(2z): one exact divide

    inv = pl.reciprocal(z, approx=True)            # feeds only small series terms
    inv2 = inv * inv
    logz = jnp.log(z)

    digamma = (logz - shift
               - inv2 * (1.0 / 12.0 - inv2 * (1.0 / 120.0 - inv2 * (1.0 / 252.0))))
    if not need_lgamma:
        return digamma, None

    lgamma = ((z - 0.5) * logz - z + _HALF_LOG_2PI
              + inv * (1.0 / 12.0 - inv2 * (1.0 / 360.0 - inv2 * (1.0 / 1260.0)))
              - jnp.log(q))                        # single log for the 4-step shift
    return digamma, lgamma


# ---------------------------------------------------------------------------
# Kernel: one (K, TILE_B) tile -> per-example loss row (1, TILE_B).
# Batch lives on the 128-lane axis; class axis (K) on sublanes.
# ---------------------------------------------------------------------------
def _loss_kernel(alpha_ref, y_ref, logp_ref, out_ref, *, ew, lpw):
    alpha = alpha_ref[...].astype(jnp.float32)          # (K, T)
    y = y_ref[...]                                      # (1, T) int32
    num_classes = alpha.shape[0]

    alpha0 = jnp.sum(alpha, axis=0, keepdims=True)      # (1, T)
    cls = jax.lax.broadcasted_iota(jnp.int32, alpha.shape, 0)
    onehot = (cls == y).astype(jnp.float32)             # (K, T)

    if ew != 0.0:
        dg_a, lg_a = _psi_lgamma(alpha, True)            # (K, T)
        dg_a0, lg_a0 = _psi_lgamma(alpha0, True)         # (1, T)
        dg_ay = jnp.sum(onehot * dg_a, axis=0, keepdims=True)
        ell = dg_ay - dg_a0
        log_beta = jnp.sum(lg_a, axis=0, keepdims=True) - lg_a0
        entropy = (log_beta + (alpha0 - float(num_classes)) * dg_a0
                   - jnp.sum((alpha - 1.0) * dg_a, axis=0, keepdims=True))
        loss = -ell - ew * entropy
    else:
        # entropy_weight == 0: digamma only at alpha_y / alpha0, never on (K, T).
        alpha_y = jnp.sum(onehot * alpha, axis=0, keepdims=True)   # VALU-only gather
        dg_ay, _ = _psi_lgamma(alpha_y, False)
        dg_a0, _ = _psi_lgamma(alpha0, False)
        loss = -(dg_ay - dg_a0)

    if lpw != 0.0:
        loss = loss - lpw * logp_ref[...].astype(jnp.float32)

    out_ref[...] = loss                                  # lane-dense (1, T) store


# ---------------------------------------------------------------------------
# Module wrapper
# ---------------------------------------------------------------------------
class BayesianLoss:
    def __init__(self, entropy_weight, log_prob_weight, reduction="mean"):
        self.entropy_weight = float(entropy_weight)
        self.log_prob_weight = float(log_prob_weight)
        self.reduction = reduction

    def __call__(self, alpha, y_true, log_prob):
        B, K = alpha.shape

        # Lane-dim tile: multiple of 128, capped so double-buffered tiles
        # (alpha + y + log_prob + out) stay under the v7x-safe VMEM budget.
        bytes_per_col = 2 * (K + 3) * 4
        cap = max(128, (_TILE_VMEM_BUDGET // bytes_per_col) // 128 * 128)
        tile_b = min(_DEFAULT_TILE_B, cap, _round_up(B, 128))
        padded_b = _round_up(B, tile_b)

        # Layout plumbing: batch onto the lane axis.
        alpha_t = jnp.transpose(alpha)                       # (K, B)
        y2 = y_true.astype(jnp.int32).reshape(1, B)
        lp2 = log_prob.reshape(1, B)
        if padded_b != B:
            pad = padded_b - B
            alpha_t = jnp.pad(alpha_t, ((0, 0), (0, pad)), constant_values=1.0)
            y2 = jnp.pad(y2, ((0, 0), (0, pad)))
            lp2 = jnp.pad(lp2, ((0, 0), (0, pad)))

        grid = (padded_b // tile_b,)
        in_specs = [
            pl.BlockSpec((K, tile_b), lambda i: (0, i)),
            pl.BlockSpec((1, tile_b), lambda i: (0, i)),
            pl.BlockSpec((1, tile_b), lambda i: (0, i)),
        ]
        out_specs = pl.BlockSpec((1, tile_b), lambda i: (0, i))

        need_entropy = self.entropy_weight != 0.0
        trans_per_elem = 3 if need_entropy else 0
        cost = pl.CostEstimate(
            flops=int(padded_b * K * (40 if need_entropy else 8) + padded_b * 80),
            transcendentals=int(padded_b * (K * trans_per_elem + 8)),
            bytes_accessed=int(padded_b * K * alpha.dtype.itemsize
                               + padded_b * (4 + 4 + 4)),
        )

        kernel = functools.partial(_loss_kernel, ew=self.entropy_weight,
                                   lpw=self.log_prob_weight)
        out = pl.pallas_call(
            kernel,
            out_shape=jax.ShapeDtypeStruct((1, padded_b), jnp.float32),
            grid_spec=pltpu.PrefetchScalarGridSpec(
                num_scalar_prefetch=0, grid=grid,
                in_specs=in_specs, out_specs=out_specs),
            compiler_params=pltpu.CompilerParams(
                dimension_semantics=("parallel",),          # megacore on v7x
                vmem_limit_bytes=32 * 1024 * 1024),
            cost_estimate=cost,
        )(alpha_t, y2, lp2)

        loss = out[0, :B]                                   # drop padded tail
        if self.reduction == "mean":
            return jnp.mean(loss)
        if self.reduction == "sum":
            return jnp.sum(loss)
        return loss


# ---------------------------------------------------------------------------
# Reference (pure JAX) for verification
# ---------------------------------------------------------------------------
def _reference(alpha, y, logp, ew, lpw, reduction):
    from jax.scipy.special import digamma, gammaln
    B, K = alpha.shape
    alpha = alpha.astype(jnp.float32)
    alpha0 = alpha.sum(-1)
    ell = digamma(alpha[jnp.arange(B), y]) - digamma(alpha0)
    loss = -ell
    if lpw != 0.0:
        loss = loss - lpw * logp
    if ew != 0.0:
        ent = (gammaln(alpha).sum(-1) - gammaln(alpha0)
               + (alpha0 - K) * digamma(alpha0)
               - ((alpha - 1.0) * digamma(alpha)).sum(-1))
        loss = loss - ew * ent
    if reduction == "mean":
        return loss.mean()
    if reduction == "sum":
        return loss.sum()
    return loss


if __name__ == "__main__":
    key = jax.random.PRNGKey(0)
    k1, k2, k3, k4, k5, k6 = jax.random.split(key, 6)

    # Case 1: entropy + log_prob regularizers, all reductions.
    B, K = 8, 16
    ew, lpw = 0.1, 0.05
    alpha = 1.0 + jax.random.uniform(k1, (B, K), jnp.float32, 0.0, 4.0)
    y_true = jax.random.randint(k2, (B,), 0, K, jnp.int32)
    log_prob = jax.random.normal(k3, (B,), jnp.float32)
    for reduction in ("mean", "sum", "none"):
        out = jax.block_until_ready(BayesianLoss(ew, lpw, reduction)(alpha, y_true, log_prob))
        ref = _reference(alpha, y_true, log_prob, ew, lpw, reduction)
        assert jnp.allclose(out, ref, rtol=1e-3, atol=1e-3), (reduction, out, ref)

    # Case 2: ragged B (exercises lane padding) and entropy_weight == 0 path.
    B2, K2 = 37, 10
    ew2, lpw2 = 0.0, 0.5
    alpha2 = 1.0 + jax.random.uniform(k4, (B2, K2), jnp.float32, 0.0, 4.0)
    y2 = jax.random.randint(k5, (B2,), 0, K2, jnp.int32)
    lp2 = jax.random.normal(k6, (B2,), jnp.float32)
    for reduction in ("mean", "none"):
        out2 = jax.block_until_ready(BayesianLoss(ew2, lpw2, reduction)(alpha2, y2, lp2))
        ref2 = _reference(alpha2, y2, lp2, ew2, lpw2, reduction)
        assert jnp.allclose(out2, ref2, rtol=1e-3, atol=1e-3), (reduction, out2, ref2)

    print("KERNEL_OK")
</pallas_src>

<mosaic_0001>
module attributes {stable_mosaic.version = 11 : i64} {
  func.func @_loss_kernel(%arg0: i32, %arg1: memref<16x128xf32, #tpu.memory_space<vmem>>, %arg2: memref<1x128xi32, #tpu.memory_space<vmem>>, %arg3: memref<1x128xf32, #tpu.memory_space<vmem>>, %arg4: memref<1x128xf32, #tpu.memory_space<vmem>>) attributes {dimension_semantics = [#tpu.dimension_semantics<parallel>], iteration_bounds = array<i64: 1>, scalar_prefetch = 0 : i64, scratch_operands = 0 : i64, tpu.core_type = #tpu.core_type<tc>, window_params = [{transform_indices = @transform_0, window_bounds = array<i64: 16, 128>}, {transform_indices = @transform_1, window_bounds = array<i64: 1, 128>}, {transform_indices = @transform_2, window_bounds = array<i64: 1, 128>}, {transform_indices = @transform_3, window_bounds = array<i64: 1, 128>}]} {
    %c0 = arith.constant 0 : index
    %c0_0 = arith.constant 0 : index
    %0 = vector.load %arg1[%c0, %c0_0] : memref<16x128xf32, #tpu.memory_space<vmem>>, vector<16x128xf32>
    %c0_1 = arith.constant 0 : index
    %c0_2 = arith.constant 0 : index
    %1 = vector.load %arg2[%c0_1, %c0_2] : memref<1x128xi32, #tpu.memory_space<vmem>>, vector<1x128xi32>
    %cst = arith.constant dense<0.000000e+00> : vector<128xf32>
    %2 = vector.multi_reduction <add>, %0, %cst [0] : vector<16x128xf32> to vector<128xf32>
    %3 = vector.shape_cast %2 : vector<128xf32> to vector<1x128xf32>
    %4 = tpu.iota {dimensions = array<i32: 0>} : vector<16x128xi32>
    %5 = vector.broadcast %1 : vector<1x128xi32> to vector<16x128xi32>
    %6 = arith.cmpi eq, %4, %5 : vector<16x128xi32>
    %7 = arith.extui %6 : vector<16x128xi1> to vector<16x128xi32>
    %8 = arith.sitofp %7 : vector<16x128xi32> to vector<16x128xf32>
    %cst_3 = arith.constant 1.000000e+00 : f32
    %9 = vector.broadcast %cst_3 : f32 to vector<16x128xf32>
    %10 = arith.addf %0, %9 : vector<16x128xf32>
    %cst_4 = arith.constant 2.000000e+00 : f32
    %11 = vector.broadcast %cst_4 : f32 to vector<16x128xf32>
    %12 = arith.addf %0, %11 : vector<16x128xf32>
    %cst_5 = arith.constant 3.000000e+00 : f32
    %13 = vector.broadcast %cst_5 : f32 to vector<16x128xf32>
    %14 = arith.addf %0, %13 : vector<16x128xf32>
    %cst_6 = arith.constant 4.000000e+00 : f32
    %15 = vector.broadcast %cst_6 : f32 to vector<16x128xf32>
    %16 = arith.addf %0, %15 : vector<16x128xf32>
    %17 = arith.mulf %0, %10 : vector<16x128xf32>
    %18 = arith.mulf %12, %14 : vector<16x128xf32>
    %19 = arith.mulf %17, %18 : vector<16x128xf32>
    %20 = arith.addf %0, %10 : vector<16x128xf32>
    %21 = arith.mulf %20, %18 : vector<16x128xf32>
    %22 = arith.addf %12, %14 : vector<16x128xf32>
    %23 = arith.mulf %22, %17 : vector<16x128xf32>
    %24 = arith.addf %21, %23 : vector<16x128xf32>
    %25 = arith.mulf %24, %16 : vector<16x128xf32>
    %cst_7 = arith.constant 5.000000e-01 : f32
    %26 = vector.broadcast %cst_7 : f32 to vector<16x128xf32>
    %27 = arith.mulf %26, %19 : vector<16x128xf32>
    %28 = arith.addf %25, %27 : vector<16x128xf32>
    %29 = arith.mulf %19, %16 : vector<16x128xf32>
    %30 = arith.divf %28, %29 : vector<16x128xf32>
    %31 = tpu.reciprocal %16 {approx = true} : vector<16x128xf32> -> vector<16x128xf32>
    %32 = arith.mulf %31, %31 : vector<16x128xf32>
    %33 = math.log %16 : vector<16x128xf32>
    %34 = arith.subf %33, %30 : vector<16x128xf32>
    %cst_8 = arith.constant 0.0039682542 : f32
    %35 = vector.broadcast %cst_8 : f32 to vector<16x128xf32>
    %36 = arith.mulf %32, %35 : vector<16x128xf32>
    %cst_9 = arith.constant 0.00833333377 : f32
    %37 = vector.broadcast %cst_9 : f32 to vector<16x128xf32>
    %38 = arith.subf %37, %36 : vector<16x128xf32>
    %39 = arith.mulf %32, %38 : vector<16x128xf32>
    %cst_10 = arith.constant 0.0833333358 : f32
    %40 = vector.broadcast %cst_10 : f32 to vector<16x128xf32>
    %41 = arith.subf %40, %39 : vector<16x128xf32>
    %42 = arith.mulf %32, %41 : vector<16x128xf32>
    %43 = arith.subf %34, %42 : vector<16x128xf32>
    %cst_11 = arith.constant 5.000000e-01 : f32
    %44 = vector.broadcast %cst_11 : f32 to vector<16x128xf32>
    %45 = arith.subf %16, %44 : vector<16x128xf32>
    %46 = arith.mulf %45, %33 : vector<16x128xf32>
    %47 = arith.subf %46, %16 : vector<16x128xf32>
    %cst_12 = arith.constant 0.918938517 : f32
    %48 = vector.broadcast %cst_12 : f32 to vector<16x128xf32>
    %49 = arith.addf %47, %48 : vector<16x128xf32>
    %cst_13 = arith.constant 7.93650805E-4 : f32
    %50 = vector.broadcast %cst_13 : f32 to vector<16x128xf32>
    %51 = arith.mulf %32, %50 : vector<16x128xf32>
    %cst_14 = arith.constant 0.00277777785 : f32
    %52 = vector.broadcast %cst_14 : f32 to vector<16x128xf32>
    %53 = arith.subf %52, %51 : vector<16x128xf32>
    %54 = arith.mulf %32, %53 : vector<16x128xf32>
    %cst_15 = arith.constant 0.0833333358 : f32
    %55 = vector.broadcast %cst_15 : f32 to vector<16x128xf32>
    %56 = arith.subf %55, %54 : vector<16x128xf32>
    %57 = arith.mulf %31, %56 : vector<16x128xf32>
    %58 = arith.addf %49, %57 : vector<16x128xf32>
    %59 = math.log %19 : vector<16x128xf32>
    %60 = arith.subf %58, %59 : vector<16x128xf32>
    %cst_16 = arith.constant 1.000000e+00 : f32
    %61 = vector.broadcast %cst_16 : f32 to vector<1x128xf32>
    %62 = arith.addf %3, %61 : vector<1x128xf32>
    %cst_17 = arith.constant 2.000000e+00 : f32
    %63 = vector.broadcast %cst_17 : f32 to vector<1x128xf32>
    %64 = arith.addf %3, %63 : vector<1x128xf32>
    %cst_18 = arith.constant 3.000000e+00 : f32
    %65 = vector.broadcast %cst_18 : f32 to vector<1x128xf32>
    %66 = arith.addf %3, %65 : vector<1x128xf32>
    %cst_19 = arith.constant 4.000000e+00 : f32
    %67 = vector.broadcast %cst_19 : f32 to vector<1x128xf32>
    %68 = arith.addf %3, %67 : vector<1x128xf32>
    %69 = arith.mulf %3, %62 : vector<1x128xf32>
    %70 = arith.mulf %64, %66 : vector<1x128xf32>
    %71 = arith.mulf %69, %70 : vector<1x128xf32>
    %72 = arith.addf %3, %62 : vector<1x128xf32>
    %73 = arith.mulf %72, %70 : vector<1x128xf32>
    %74 = arith.addf %64, %66 : vector<1x128xf32>
    %75 = arith.mulf %74, %69 : vector<1x128xf32>
    %76 = arith.addf %73, %75 : vector<1x128xf32>
    %77 = arith.mulf %76, %68 : vector<1x128xf32>
    %cst_20 = arith.constant 5.000000e-01 : f32
    %78 = vector.broadcast %cst_20 : f32 to vector<1x128xf32>
    %79 = arith.mulf %78, %71 : vector<1x128xf32>
    %80 = arith.addf %77, %79 : vector<1x128xf32>
    %81 = arith.mulf %71, %68 : vector<1x128xf32>
    %82 = arith.divf %80, %81 : vector<1x128xf32>
    %83 = tpu.reciprocal %68 {approx = true} : vector<1x128xf32> -> vector<1x128xf32>
    %84 = arith.mulf %83, %83 : vector<1x128xf32>
    %85 = math.log %68 : vector<1x128xf32>
    %86 = arith.subf %85, %82 : vector<1x128xf32>
    %cst_21 = arith.constant 0.0039682542 : f32
    %87 = vector.broadcast %cst_21 : f32 to vector<1x128xf32>
    %88 = arith.mulf %84, %87 : vector<1x128xf32>
    %cst_22 = arith.constant 0.00833333377 : f32
    %89 = vector.broadcast %cst_22 : f32 to vector<1x128xf32>
    %90 = arith.subf %89, %88 : vector<1x128xf32>
    %91 = arith.mulf %84, %90 : vector<1x128xf32>
    %cst_23 = arith.constant 0.0833333358 : f32
    %92 = vector.broadcast %cst_23 : f32 to vector<1x128xf32>
    %93 = arith.subf %92, %91 : vector<1x128xf32>
    %94 = arith.mulf %84, %93 : vector<1x128xf32>
    %95 = arith.subf %86, %94 : vector<1x128xf32>
    %cst_24 = arith.constant 5.000000e-01 : f32
    %96 = vector.broadcast %cst_24 : f32 to vector<1x128xf32>
    %97 = arith.subf %68, %96 : vector<1x128xf32>
    %98 = arith.mulf %97, %85 : vector<1x128xf32>
    %99 = arith.subf %98, %68 : vector<1x128xf32>
    %cst_25 = arith.constant 0.918938517 : f32
    %100 = vector.broadcast %cst_25 : f32 to vector<1x128xf32>
    %101 = arith.addf %99, %100 : vector<1x128xf32>
    %cst_26 = arith.constant 7.93650805E-4 : f32
    %102 = vector.broadcast %cst_26 : f32 to vector<1x128xf32>
    %103 = arith.mulf %84, %102 : vector<1x128xf32>
    %cst_27 = arith.constant 0.00277777785 : f32
    %104 = vector.broadcast %cst_27 : f32 to vector<1x128xf32>
    %105 = arith.subf %104, %103 : vector<1x128xf32>
    %106 = arith.mulf %84, %105 : vector<1x128xf32>
    %cst_28 = arith.constant 0.0833333358 : f32
    %107 = vector.broadcast %cst_28 : f32 to vector<1x128xf32>
    %108 = arith.subf %107, %106 : vector<1x128xf32>
    %109 = arith.mulf %83, %108 : vector<1x128xf32>
    %110 = arith.addf %101, %109 : vector<1x128xf32>
    %111 = math.log %71 : vector<1x128xf32>
    %112 = arith.subf %110, %111 : vector<1x128xf32>
    %113 = arith.mulf %8, %43 : vector<16x128xf32>
    %cst_29 = arith.constant dense<0.000000e+00> : vector<128xf32>
    %114 = vector.multi_reduction <add>, %113, %cst_29 [0] : vector<16x128xf32> to vector<128xf32>
    %115 = vector.shape_cast %114 : vector<128xf32> to vector<1x128xf32>
    %116 = arith.subf %115, %95 : vector<1x128xf32>
    %cst_30 = arith.constant dense<0.000000e+00> : vector<128xf32>
    %117 = vector.multi_reduction <add>, %60, %cst_30 [0] : vector<16x128xf32> to vector<128xf32>
    %118 = vector.shape_cast %117 : vector<128xf32> to vector<1x128xf32>
    %119 = arith.subf %118, %112 : vector<1x128xf32>
    %cst_31 = arith.constant 1.600000e+01 : f32
    %120 = vector.broadcast %cst_31 : f32 to vector<1x128xf32>
    %121 = arith.subf %3, %120 : vector<1x128xf32>
    %122 = arith.mulf %121, %95 : vector<1x128xf32>
    %123 = arith.addf %119, %122 : vector<1x128xf32>
    %cst_32 = arith.constant 1.000000e+00 : f32
    %124 = vector.broadcast %cst_32 : f32 to vector<16x128xf32>
    %125 = arith.subf %0, %124 : vector<16x128xf32>
    %126 = arith.mulf %125, %43 : vector<16x128xf32>
    %cst_33 = arith.constant dense<0.000000e+00> : vector<128xf32>
    %127 = vector.multi_reduction <add>, %126, %cst_33 [0] : vector<16x128xf32> to vector<128xf32>
    %128 = vector.shape_cast %127 : vector<128xf32> to vector<1x128xf32>
    %129 = arith.subf %123, %128 : vector<1x128xf32>
    %cst_34 = arith.constant 0.000000e+00 : f32
    %130 = vector.broadcast %cst_34 : f32 to vector<1x128xf32>
    %131 = arith.subf %130, %116 : vector<1x128xf32>
    %cst_35 = arith.constant 1.000000e-01 : f32
    %132 = vector.broadcast %cst_35 : f32 to vector<1x128xf32>
    %133 = arith.mulf %132, %129 : vector<1x128xf32>
    %134 = arith.subf %131, %133 : vector<1x128xf32>
    %c0_36 = arith.constant 0 : index
    %c0_37 = arith.constant 0 : index
    %135 = vector.load %arg3[%c0_36, %c0_37] : memref<1x128xf32, #tpu.memory_space<vmem>>, vector<1x128xf32>
    %cst_38 = arith.constant 5.000000e-02 : f32
    %136 = vector.broadcast %cst_38 : f32 to vector<1x128xf32>
    %137 = arith.mulf %136, %135 : vector<1x128xf32>
    %138 = arith.subf %134, %137 : vector<1x128xf32>
    %c0_39 = arith.constant 0 : index
    %c0_40 = arith.constant 0 : index
    %139 = vector.load %arg4[%c0_39, %c0_40] : memref<1x128xf32, #tpu.memory_space<vmem>>, vector<1x128xf32>
    tpu.vector_store %arg4[%c0_39, %c0_40], %138 {strides = array<i32>} : memref<1x128xf32, #tpu.memory_space<vmem>>, vector<1x128xf32>,
    return
  }
  func.func @transform_0(%arg0: i32) -> (i32, i32) {
    %c0_i32 = arith.constant 0 : i32
    %c0_i32_0 = arith.constant 0 : i32
    return %c0_i32, %arg0 : i32, i32
  }
  func.func @transform_1(%arg0: i32) -> (i32, i32) {
    %c0_i32 = arith.constant 0 : i32
    %c0_i32_0 = arith.constant 0 : i32
    return %c0_i32, %arg0 : i32, i32
  }
  func.func @transform_2(%arg0: i32) -> (i32, i32) {
    %c0_i32 = arith.constant 0 : i32
    %c0_i32_0 = arith.constant 0 : i32
    return %c0_i32, %arg0 : i32, i32
  }
  func.func @transform_3(%arg0: i32) -> (i32, i32) {
    %c0_i32 = arith.constant 0 : i32
    %c0_i32_0 = arith.constant 0 : i32
    return %c0_i32, %arg0 : i32, i32
  }
}

</mosaic_0001>

<llo_original>
// kernel: tpu_custom_call.1
$region0: #{tpu_custom_call.1}
  #allocation0 [shape = 'u32[]', space=smem, size = 0x4, offset = 0x4, fixed_abs, tag = 'smem constant byte address 0x4 - core index']
  #allocation1 [shape = 'u32[144,128]{1,0:T(1,128)}', space=vmem, size = 0x12000, scoped, tag = 'internal scratch']
  %s0 = inlined_call_operand.hbm [shape: f32[16,128], index: 0, kind: input, shape index: {}]
  %s1 = inlined_call_operand.vmem [shape: s32[1,128], index: 1, kind: input, shape index: {}]
  %s2 = inlined_call_operand.vmem [shape: f32[1,128], index: 2, kind: input, shape index: {}]
  %s3 = inlined_call_operand.hbm [shape: f32[1,128], index: 3, kind: output, shape index: {}]
  %s4 = sld [smem:[#allocation0]]
  $region26: #{tpu_custom_call.1} parent=0
    _
  %s6 = ssub.s32 1, %s4
  %s7 = scalar_select 0, %s6, %s4
  $region1: #{tpu_custom_call.1} parent=0
    #allocation2 [shape = 'u8[8192]{0}', space=vmem, size = 0x2000, scoped, tag = 'input window, operand 0, single buffered']
    #allocation3 [shape = 's32[1]{0}', space=sflag, size = 0x4, scoped, tag = 'scoped memory for tpu_custom_call.1']
    #allocation4 [shape = 's32[1]{0}', space=sflag, size = 0x4, scoped, tag = 'scoped memory for tpu_custom_call.1']
    #allocation5 [shape = 'u8[512]{0}', space=vmem, size = 0x400, scoped, tag = 'output window, operand 0, single buffered']
    %8 = vsyncpa [#allocation3], 0
    %9 = vsyncpa [#allocation4], 0
    // Predicated region
    $region2: #{tpu_custom_call.1} parent=1 // pred_check
      _
    $region3: #{tpu_custom_call.1} parent=1 // pred_check_branch
      %11 = sbr.rel (0) target = $region5
    $region4: #{tpu_custom_call.1} parent=1 // pred_region
      %s13 = ssub.s32 256, 256
      %14 = vsyncadd [#allocation3], %s13
      %s15 = sshll.u32 [#allocation2], 4
      %s16 = int_to_ptr.vmem [resolvable:$true] %s15
      %21 = dma.hbm_to_vmem [thread:$0]  %s0, 256, %s16, [#allocation3], 128, 128, 8
    $region5: #{tpu_custom_call.1} parent=1 // pred_fallthru
      _
    // Predicated region
    $region6: #{tpu_custom_call.1} parent=1 // pred_check
      _
    $region7: #{tpu_custom_call.1} parent=1 // pred_check_branch
      %23 = sbr.rel (0) target = $region9
    $region8: #{tpu_custom_call.1} parent=1 // pred_region
      _
    $region9: #{tpu_custom_call.1} parent=1 // pred_fallthru
      _
    // Predicated region
    $region10: #{tpu_custom_call.1} parent=1 // pred_check
      _
    $region11: #{tpu_custom_call.1} parent=1 // pred_check_branch
      %25 = sbr.rel (0) target = $region13
    $region12: #{tpu_custom_call.1} parent=1 // pred_region
      _
    $region13: #{tpu_custom_call.1} parent=1 // pred_fallthru
      _
    // Predicated region
    $region14: #{tpu_custom_call.1} parent=1 // pred_check
      _
    $region15: #{tpu_custom_call.1} parent=1 // pred_check_branch
      %27 = sbr.rel (0) target = $region17
    $region16: #{tpu_custom_call.1} parent=1 // pred_region
      %28 = dma.done [#allocation3], 256
    $region17: #{tpu_custom_call.1} parent=1 // pred_fallthru
      _
    %v29 = vld [vmem:[#allocation2] sm:$0xff]
    %v30 = vld [vmem:[#allocation2 + $0x8] sm:$0xff]
    %v31 = vld [vmem:[%s1] sm:$0x1]
    %v32 = vadd.f32 %v29, %v30
    %v33 = vrot.slane %v32, 4
    %v34 = vadd.f32 %v32, %v33
    %v35 = vrot.slane %v34, 2
    %v36 = vadd.f32 %v34, %v35
    %v37 = vrot.slane %v36, 1
    %v38 = vadd.f32 %v36, %v37
    %v39 = vlaneseq
    %v40 = vshrl.u32 %v39, 7
    %v41 = vadd.s32 %v40, 8
    %v42 = vlaneseq
    %v43 = vshrl.u32 %v42, 7
    %v44 = vsub.s32 0, %v43
    %v45 = vrot.slane %v31, %v44
    %vm46 = vcmp.eq.s32.totalorder %v40, %v45
    %vm47 = vcmp.eq.s32.totalorder %v41, %v45
    %v48 = vsel %vm46, 1, 0
    %v49 = vsel %vm47, 1, 0
    %v50 = vcvt.s32.f32 %v48
    %v51 = vcvt.s32.f32 %v49
    %v52 = vadd.f32 %v29, 1.0
    %v53 = vadd.f32 %v30, 1.0
    %v54 = vadd.f32 %v29, 2.0
    %v55 = vadd.f32 %v30, 2.0
    %v56 = vadd.f32 %v29, 3.0
    %v57 = vadd.f32 %v30, 3.0
    %v58 = vadd.f32 %v29, 4.0
    %v59 = vadd.f32 %v30, 4.0
    %v60 = vmul.f32 %v29, %v52
    %v61 = vmul.f32 %v30, %v53
    %v62 = vmul.f32 %v54, %v56
    %v63 = vmul.f32 %v55, %v57
    %v64 = vmul.f32 %v60, %v62
    %v65 = vmul.f32 %v61, %v63
    %v66 = vadd.f32 %v29, %v52
    %v67 = vadd.f32 %v30, %v53
    %v68 = vmul.f32 %v66, %v62
    %v69 = vmul.f32 %v67, %v63
    %v70 = vadd.f32 %v54, %v56
    %v71 = vadd.f32 %v55, %v57
    %v72 = vmul.f32 %v70, %v60
    %v73 = vmul.f32 %v71, %v61
    %v74 = vadd.f32 %v68, %v72
    %v75 = vadd.f32 %v69, %v73
    %v76 = vmul.f32 %v74, %v58
    %v77 = vmul.f32 %v75, %v59
    %v78 = vmul.f32 %v64, 0.5
    %v79 = vmul.f32 %v65, 0.5
    %v80 = vadd.f32 %v76, %v78
    %v81 = vadd.f32 %v77, %v79
    %v82 = vmul.f32 %v64, %v58
    %v83 = vmul.f32 %v65, %v59
    %v84 = vrcp.pop %v82
    %v85 = vmul.f32 %v80, %v84
    %v86 = vrcp.pop %v83
    %v87 = vmul.f32 %v81, %v86
    %v88 = vrcp.pop %v58
    %v89 = vrcp.pop %v59
    %v90 = vmul.f32 %v88, %v88
    %v91 = vmul.f32 %v89, %v89
    %v92 = vlog2.pop %v58
    %v93 = vmul.f32 %v92, 0.6931472
    %v94 = vlog2.pop %v59
    %v95 = vmul.f32 %v94, 0.6931472
    %v96 = vsub.f32 %v93, %v85
    %v97 = vsub.f32 %v95, %v87
    %v98 = vmul.f32 %v90, 0.003968254
    %v99 = vmul.f32 %v91, 0.003968254
    %v100 = vsub.f32 0.008333334, %v98
    %v101 = vsub.f32 0.008333334, %v99
    %v102 = vmul.f32 %v90, %v100
    %v103 = vmul.f32 %v91, %v101
    %v104 = vsub.f32 0.083333336, %v102
    %v105 = vsub.f32 0.083333336, %v103
    %v106 = vmul.f32 %v90, %v104
    %v107 = vmul.f32 %v91, %v105
    %v108 = vsub.f32 %v96, %v106
    %v109 = vsub.f32 %v97, %v107
    %v110 = vsub.f32 %v58, 0.5
    %v111 = vsub.f32 %v59, 0.5
    %v112 = vmul.f32 %v110, %v93
    %v113 = vmul.f32 %v111, %v95
    %v114 = vsub.f32 %v112, %v58
    %v115 = vsub.f32 %v113, %v59
    %v116 = vadd.f32 %v114, 0.9189385
    %v117 = vadd.f32 %v115, 0.9189385
    %v118 = vmul.f32 %v90, 0.0007936508
    %v119 = vmul.f32 %v91, 0.0007936508
    %v120 = vsub.f32 0.0027777778, %v118
    %v121 = vsub.f32 0.0027777778, %v119
    %v122 = vmul.f32 %v90, %v120
    %v123 = vmul.f32 %v91, %v121
    %v124 = vsub.f32 0.083333336, %v122
    %v125 = vsub.f32 0.083333336, %v123
    %v126 = vmul.f32 %v88, %v124
    %v127 = vmul.f32 %v89, %v125
    %v128 = vadd.f32 %v116, %v126
    %v129 = vadd.f32 %v117, %v127
    %v130 = vlog2.pop %v64
    %v131 = vmul.f32 %v130, 0.6931472
    %v132 = vlog2.pop %v65
    %v133 = vmul.f32 %v132, 0.6931472
    %v134 = vsub.f32 %v128, %v131
    %v135 = vsub.f32 %v129, %v133
    %v136 = vadd.f32 %v38, 1.0
    %v137 = vadd.f32 %v38, 2.0
    %v138 = vadd.f32 %v38, 3.0
    %v139 = vadd.f32 %v38, 4.0
    %v140 = vmul.f32 %v38, %v136
    %v141 = vmul.f32 %v137, %v138
    %v142 = vmul.f32 %v140, %v141
    %v143 = vadd.f32 %v38, %v136
    %v144 = vmul.f32 %v143, %v141
    %v145 = vadd.f32 %v137, %v138
    %v146 = vmul.f32 %v145, %v140
    %v147 = vadd.f32 %v144, %v146
    %v148 = vmul.f32 %v147, %v139
    %v149 = vmul.f32 %v142, 0.5
    %v150 = vadd.f32 %v148, %v149
    %v151 = vmul.f32 %v142, %v139
    %v152 = vrcp.pop %v151
    %v153 = vmul.f32 %v150, %v152
    %v154 = vrcp.pop %v139
    %v155 = vmul.f32 %v154, %v154
    %v156 = vlog2.pop %v139
    %v157 = vmul.f32 %v156, 0.6931472
    %v158 = vsub.f32 %v157, %v153
    %v159 = vmul.f32 %v155, 0.003968254
    %v160 = vsub.f32 0.008333334, %v159
    %v161 = vmul.f32 %v155, %v160
    %v162 = vsub.f32 0.083333336, %v161
    %v163 = vmul.f32 %v155, %v162
    %v164 = vsub.f32 %v158, %v163
    %v165 = vsub.f32 %v139, 0.5
    %v166 = vmul.f32 %v165, %v157
    %v167 = vsub.f32 %v166, %v139
    %v168 = vadd.f32 %v167, 0.9189385
    %v169 = vmul.f32 %v155, 0.0007936508
    %v170 = vsub.f32 0.0027777778, %v169
    %v171 = vmul.f32 %v155, %v170
    %v172 = vsub.f32 0.083333336, %v171
    %v173 = vmul.f32 %v154, %v172
    %v174 = vadd.f32 %v168, %v173
    %v175 = vlog2.pop %v142
    %v176 = vmul.f32 %v175, 0.6931472
    %v177 = vsub.f32 %v174, %v176
    %v178 = vmul.f32 %v50, %v108
    %v179 = vmul.f32 %v51, %v109
    %v180 = vadd.f32 %v178, %v179
    %v181 = vrot.slane %v180, 4
    %v182 = vadd.f32 %v180, %v181
    %v183 = vrot.slane %v182, 2
    %v184 = vadd.f32 %v182, %v183
    %v185 = vrot.slane %v184, 1
    %v186 = vadd.f32 %v184, %v185
    %v187 = vsub.f32 %v186, %v164
    %v188 = vadd.f32 %v134, %v135
    %v189 = vrot.slane %v188, 4
    %v190 = vadd.f32 %v188, %v189
    %v191 = vrot.slane %v190, 2
    %v192 = vadd.f32 %v190, %v191
    %v193 = vrot.slane %v192, 1
    %v194 = vadd.f32 %v192, %v193
    %v195 = vsub.f32 %v194, %v177
    %v196 = vsub.f32 %v38, 16.0
    %v197 = vmul.f32 %v196, %v164
    %v198 = vadd.f32 %v195, %v197
    %v199 = vsub.f32 %v29, 1.0
    %v200 = vsub.f32 %v30, 1.0
    %v201 = vmul.f32 %v199, %v108
    %v202 = vmul.f32 %v200, %v109
    %v203 = vadd.f32 %v201, %v202
    %v204 = vrot.slane %v203, 4
    %v205 = vadd.f32 %v203, %v204
    %v206 = vrot.slane %v205, 2
    %v207 = vadd.f32 %v205, %v206
    %v208 = vrot.slane %v207, 1
    %v209 = vadd.f32 %v207, %v208
    %v210 = vsub.f32 %v198, %v209
    %v211 = vsub.f32 0.0, %v187
    %v212 = vmul.f32 %v210, 0.1
    %v213 = vsub.f32 %v211, %v212
    %v214 = vld [vmem:[%s2] sm:$0x1]
    %v215 = vmul.f32 %v214, 0.05
    %v216 = vsub.f32 %v213, %v215
    %217 = vst [vmem:[#allocation5] sm:$0x1] %v216
    // Predicated region
    $region18: #{tpu_custom_call.1} parent=1 // pred_check
      _
    $region19: #{tpu_custom_call.1} parent=1 // pred_check_branch
      %219 = sbr.rel (0) target = $region21
    $region20: #{tpu_custom_call.1} parent=1 // pred_region
      %s221 = ssub.s32 16, 16
      %222 = vsyncadd [#allocation4], %s221
      %s224 = sshll.u32 [#allocation5], 4
      %s225 = int_to_ptr.vmem [resolvable:$true] %s224
      %227 = dma.vmem_to_hbm [thread:$0]  %s225, 16, %s3, [#allocation4]
    $region21: #{tpu_custom_call.1} parent=1 // pred_fallthru
      _
    // Predicated region
    $region22: #{tpu_custom_call.1} parent=1 // pred_check
      _
    $region23: #{tpu_custom_call.1} parent=1 // pred_check_branch
      %229 = sbr.rel (0) target = $region25
    $region24: #{tpu_custom_call.1} parent=1 // pred_region
      %230 = dma.done [#allocation4], 16
    $region25: #{tpu_custom_call.1} parent=1 // pred_fallthru
      _
    %231 = vsyncpa [#allocation3], 1
    %232 = vsyncpa [#allocation4], 1

</llo_original>
